<compile_context>
chip_gen: v5e
topology: v5e:2x2
jax: 0.10.0
libtpu: 0.0.40
codegen_flags: <defaults>
</compile_context>

<pallas_src>
import math

import jax
import jax.numpy as jnp
from jax.experimental import pallas as pl
from jax.experimental.pallas import tpu as pltpu

_SQRT_2_OVER_PI = math.sqrt(2.0 / math.pi)


def _gelu_ref_formula(x):
    # Exact reproduction of the PyTorch module's GELU.forward (including its
    # unusual (x + 0.044715) * x**3 grouping).  x*x*x instead of jnp.power
    # keeps it on the VALU and is NaN-safe for negative inputs.
    x3 = x * x * x
    return 0.5 * x * (1.0 + jnp.tanh(
        jnp.float32(_SQRT_2_OVER_PI) * (x + 0.044715) * x3))


def _ffn_kernel(x_ref, w1_ref, b1_ref, w2_ref, b2_ref, o_ref, acc_ref):
    # x_ref:  (tm, Ep)    token tile (resident across all H slabs)
    # w1_ref: (Ep, th)    hidden slab of W1 (mxu dtype)
    # b1_ref: (1, th)
    # w2_ref: (th, Ep)    hidden slab of W2 (mxu dtype)
    # b2_ref: (1, Ep)
    # o_ref:  (tm, Ep)
    # acc_ref:(tm, Ep)    f32 accumulator (scratch)
    h_idx = pl.program_id(1)

    @pl.when(h_idx == 0)
    def _init():
        # Fold the second-layer bias into the accumulator initialization.
        acc_ref[...] = jnp.broadcast_to(
            b2_ref[...].astype(jnp.float32), acc_ref.shape)

    # First linear: bf16 (or native) operands on the MXU, f32 accumulation.
    hid = jnp.dot(x_ref[...].astype(w1_ref.dtype), w1_ref[...],
                  preferred_element_type=jnp.float32)
    hid = hid + b1_ref[...].astype(jnp.float32)

    # Custom GELU in f32 (tanh -> EUP, rest VALU; hides under the MXU).
    g = _gelu_ref_formula(hid)

    # Second linear for this hidden slab, accumulated in f32.
    acc_ref[...] += jnp.dot(g.astype(w2_ref.dtype), w2_ref[...],
                            preferred_element_type=jnp.float32)

    @pl.when(h_idx == pl.num_programs(1) - 1)
    def _finalize():
        o_ref[...] = acc_ref[...].astype(o_ref.dtype)


def _round_up(v, m):
    return ((v + m - 1) // m) * m


def _round_down(v, m):
    return max(m, (v // m) * m)


def _vmem_capacity_bytes(default=64 << 20):
    # Trace-time hardware query; conservative (v7x-sized) fallback.
    try:
        info = pltpu.get_tpu_info()
        cap = getattr(info, "vmem_capacity_bytes", None)
        if cap:
            return int(cap)
    except Exception:
        pass
    return default


def _vmem_estimate(tm, th, Ep, x_sz, w_sz, w_bufs):
    """Rough VMEM working set for one grid step (buffers + temporaries)."""
    x_buf = 2 * tm * Ep * x_sz          # double-buffered x tile
    out_buf = 2 * tm * Ep * x_sz        # output tile
    acc = tm * Ep * 4                   # f32 accumulator scratch
    w1_buf = w_bufs * Ep * th * w_sz    # W1 slab (multi-buffered)
    w2_buf = w_bufs * th * Ep * w_sz    # W2 slab (multi-buffered)
    bias = 2 * (th + Ep) * w_sz
    temps = 2 * tm * th * 4             # f32 hid / gelu intermediates
    return x_buf + out_buf + acc + w1_buf + w2_buf + bias + temps


def feedforward_pallas(x, w1, b1, w2, b2, *, mxu_dtype=None,
                       tm_target=None, th_target=None, weight_buffers=None):
    """Fused FeedForward: Linear(E->4E) -> custom GELU -> Linear(4E->E).

    x:  (batch, seq, emb_dim)
    w1: (E, H), b1: (H,) or (1, H)   -- first Linear (input-major layout)
    w2: (H, E), b2: (E,) or (1, E)   -- second Linear (input-major layout)
    """
    B, S, E = x.shape
    H = w1.shape[1]
    M = B * S
    x2d = x.reshape(M, E)
    b1 = b1.reshape(1, -1)
    b2 = b2.reshape(1, -1)

    # --- dtype policy: bf16 MXU operands (f32 accumulation) for f32 inputs.
    if mxu_dtype is None:
        mxu_dtype = jnp.bfloat16 if x.dtype == jnp.float32 else x.dtype
    w1 = w1.astype(mxu_dtype)
    w2 = w2.astype(mxu_dtype)

    # --- hardware-aware VMEM budget and tile targets.
    vmem_cap = _vmem_capacity_bytes()
    big_vmem = vmem_cap >= (96 << 20)            # v5e/v6e (128 MiB) vs v7x (64 MiB)
    vmem_limit = max(min(int(0.82 * vmem_cap), vmem_cap - (2 << 20)), 32 << 20)
    tile_budget = int(0.85 * vmem_limit)
    if tm_target is None:
        tm_target = 1024 if big_vmem else 512
    if th_target is None:
        th_target = 2048 if big_vmem else 1024

    x_sz = jnp.dtype(x.dtype).itemsize
    w_sz = jnp.dtype(mxu_dtype).itemsize

    # --- tile selection (lane-dense, VMEM-budgeted; shrink th first, tm last
    #     since tm sets the weight re-stream traffic).
    Ep = _round_up(E, 128)
    th = min(_round_down(max(th_target, 128), 128), _round_up(H, 128))
    tm = M if M <= tm_target else _round_down(tm_target, 128)
    tm = min(tm, M)
    while _vmem_estimate(tm, th, Ep, x_sz, w_sz, 2) > tile_budget:
        if th > 128:
            th = max(128, _round_down(th // 2, 128))
        elif tm > 256:
            tm = max(256, _round_down(tm // 2, 128))
        else:
            break
    Hp = _round_up(H, th)
    n_m = pl.cdiv(M, tm)
    n_h = Hp // th

    # Deeper buffering on the weight streams when VMEM is plentiful.
    if weight_buffers is None:
        weight_buffers = 3 if (big_vmem and n_h >= 3 and
                               _vmem_estimate(tm, th, Ep, x_sz, w_sz, 3)
                               <= tile_budget) else 2
    if weight_buffers > 2:
        w1_spec = pl.BlockSpec((Ep, th), lambda i, h: (0, h),
                               pipeline_mode=pl.Buffered(weight_buffers))
        w2_spec = pl.BlockSpec((th, Ep), lambda i, h: (h, 0),
                               pipeline_mode=pl.Buffered(weight_buffers))
    else:
        w1_spec = pl.BlockSpec((Ep, th), lambda i, h: (0, h))
        w2_spec = pl.BlockSpec((th, Ep), lambda i, h: (h, 0))

    # --- zero-pad E (lane-dense output) and H (exact: gelu(0) == 0).
    if Ep != E:
        pe = Ep - E
        x2d = jnp.pad(x2d, ((0, 0), (0, pe)))
        w1 = jnp.pad(w1, ((0, pe), (0, 0)))
        w2 = jnp.pad(w2, ((0, 0), (0, pe)))
        b2 = jnp.pad(b2, ((0, 0), (0, pe)))
    if Hp != H:
        ph = Hp - H
        w1 = jnp.pad(w1, ((0, 0), (0, ph)))
        b1 = jnp.pad(b1, ((0, 0), (0, ph)))
        w2 = jnp.pad(w2, ((0, ph), (0, 0)))

    cost = pl.CostEstimate(
        flops=4 * M * Ep * Hp,
        transcendentals=M * Hp,
        bytes_accessed=(2 * M * Ep * x_sz                 # x in + out
                        + n_m * 2 * Ep * Hp * w_sz        # weights per M tile
                        + (Hp + Ep) * w_sz),              # biases
    )

    out2d = pl.pallas_call(
        _ffn_kernel,
        out_shape=jax.ShapeDtypeStruct((M, Ep), x.dtype),
        grid_spec=pltpu.PrefetchScalarGridSpec(
            num_scalar_prefetch=0,
            grid=(n_m, n_h),
            in_specs=[
                pl.BlockSpec((tm, Ep), lambda i, h: (i, 0)),   # x tile (resident over H)
                w1_spec,                                        # W1 slab
                pl.BlockSpec((1, th), lambda i, h: (0, h)),     # b1 slab
                w2_spec,                                        # W2 slab
                pl.BlockSpec((1, Ep), lambda i, h: (0, 0)),     # b2 (resident)
            ],
            out_specs=pl.BlockSpec((tm, Ep), lambda i, h: (i, 0)),
            scratch_shapes=[pltpu.VMEM((tm, Ep), jnp.float32)],
        ),
        compiler_params=pltpu.CompilerParams(
            dimension_semantics=("parallel", "arbitrary"),
            vmem_limit_bytes=vmem_limit,
        ),
        cost_estimate=cost,
    )(x2d, w1, b1, w2, b2)

    if Ep != E:
        out2d = out2d[:, :E]
    return out2d.reshape(B, S, E)


def feedforward_reference(x, w1, b1, w2, b2):
    """Pure-JAX f32 reference matching the PyTorch forward."""
    h = jnp.einsum("bse,eh->bsh", x, w1) + b1.reshape(-1)
    g = _gelu_ref_formula(h)
    return jnp.einsum("bsh,he->bse", g, w2) + b2.reshape(-1)


def _make_params(key, E, H, dtype=jnp.float32):
    kw1, kb1, kw2, kb2 = jax.random.split(key, 4)
    w1 = jax.random.normal(kw1, (E, H), dtype=dtype) * 0.05
    b1 = jax.random.normal(kb1, (H,), dtype=dtype) * 0.05
    w2 = jax.random.normal(kw2, (H, E), dtype=dtype) * 0.05
    b2 = jax.random.normal(kb2, (E,), dtype=dtype) * 0.05
    return w1, b1, w2, b2


if __name__ == "__main__":
    key = jax.random.PRNGKey(0)

    # cfg = {'emb_dim': 32}  -> hidden = 4 * 32 = 128
    B, S, E = 2, 8, 32
    H = 4 * E
    kx, kp = jax.random.split(key)
    x = jax.random.normal(kx, (B, S, E), dtype=jnp.float32)
    w1, b1, w2, b2 = _make_params(kp, E, H)
    ref = feedforward_reference(x, w1, b1, w2, b2)

    # 1) full-precision MXU path: tight tolerance vs f32 reference.
    out_f32 = feedforward_pallas(x, w1, b1, w2, b2, mxu_dtype=jnp.float32)
    jax.block_until_ready(out_f32)
    assert out_f32.shape == (B, S, E)
    assert jnp.allclose(out_f32, ref, atol=1e-4, rtol=1e-4), "f32 path mismatch"

    # 2) default fast path (bf16 MXU operands, f32 accumulation): loose tolerance.
    out_bf16 = feedforward_pallas(x, w1, b1, w2, b2)
    jax.block_until_ready(out_bf16)
    assert jnp.allclose(out_bf16, ref, atol=3e-2, rtol=3e-2), "bf16 path mismatch"

    # 3) tiled path: multiple M tiles, multiple H slabs with the f32 accumulator,
    #    and 3-deep weight-stream buffering (forced so the path is exercised).
    B2, S2, E2 = 2, 128, 128
    H2 = 4 * E2
    kx2, kp2 = jax.random.split(jax.random.PRNGKey(1))
    x2 = jax.random.normal(kx2, (B2, S2, E2), dtype=jnp.float32)
    p2 = _make_params(kp2, E2, H2)
    out2 = feedforward_pallas(x2, *p2, mxu_dtype=jnp.float32,
                              tm_target=128, th_target=128, weight_buffers=3)
    jax.block_until_ready(out2)
    ref2 = feedforward_reference(x2, *p2)
    assert jnp.allclose(out2, ref2, atol=1e-4, rtol=1e-4), "tiled path mismatch"

    print("KERNEL_OK")
</pallas_src>

<mosaic_0001>
module attributes {stable_mosaic.version = 11 : i64} {
  func.func @_ffn_kernel(%arg0: i32, %arg1: i32, %arg2: memref<16x128xf32, #tpu.memory_space<vmem>>, %arg3: memref<128x128xf32, #tpu.memory_space<vmem>>, %arg4: memref<1x128xf32, #tpu.memory_space<vmem>>, %arg5: memref<128x128xf32, #tpu.memory_space<vmem>>, %arg6: memref<1x128xf32, #tpu.memory_space<vmem>>, %arg7: memref<16x128xf32, #tpu.memory_space<vmem>>, %arg8: memref<16x128xf32, #tpu.memory_space<vmem>>) attributes {dimension_semantics = [#tpu.dimension_semantics<parallel>, #tpu.dimension_semantics<arbitrary>], iteration_bounds = array<i64: 1, 1>, scalar_prefetch = 0 : i64, scratch_operands = 1 : i64, tpu.core_type = #tpu.core_type<tc>, window_params = [{transform_indices = @transform_0, window_bounds = array<i64: 16, 128>}, {transform_indices = @transform_1, window_bounds = array<i64: 128, 128>}, {transform_indices = @transform_2, window_bounds = array<i64: 1, 128>}, {transform_indices = @transform_3, window_bounds = array<i64: 128, 128>}, {pipeline_mode = #tpu.pipeline_mode<synchronous>, transform_indices = @transform_4, window_bounds = array<i64: 1, 128>}, {transform_indices = @transform_5, window_bounds = array<i64: 16, 128>}]} {
    %c0_i32 = arith.constant 0 : i32
    %0 = arith.cmpi eq, %arg1, %c0_i32 : i32
    %1 = arith.extui %0 : i1 to i32
    %c0_i32_0 = arith.constant 0 : i32
    %2 = arith.cmpi ne, %1, %c0_i32_0 : i32
    scf.if %2 {
      %c0_19 = arith.constant 0 : index
      %c0_20 = arith.constant 0 : index
      %30 = vector.load %arg6[%c0_19, %c0_20] : memref<1x128xf32, #tpu.memory_space<vmem>>, vector<1x128xf32>
      %31 = vector.shape_cast %30 : vector<1x128xf32> to vector<1x128xf32>
      %32 = vector.broadcast %31 : vector<1x128xf32> to vector<16x128xf32>
      %c0_21 = arith.constant 0 : index
      %c0_22 = arith.constant 0 : index
      %33 = vector.load %arg8[%c0_21, %c0_22] : memref<16x128xf32, #tpu.memory_space<vmem>>, vector<16x128xf32>
      tpu.vector_store %arg8[%c0_21, %c0_22], %32 {strides = array<i32>} : memref<16x128xf32, #tpu.memory_space<vmem>>, vector<16x128xf32>,
    } else {
    }
    %c0 = arith.constant 0 : index
    %c0_1 = arith.constant 0 : index
    %3 = vector.load %arg2[%c0, %c0_1] : memref<16x128xf32, #tpu.memory_space<vmem>>, vector<16x128xf32>
    %c0_2 = arith.constant 0 : index
    %c0_3 = arith.constant 0 : index
    %4 = vector.load %arg3[%c0_2, %c0_3] : memref<128x128xf32, #tpu.memory_space<vmem>>, vector<128x128xf32>
    %cst = arith.constant dense<0.000000e+00> : vector<16x128xf32>
    %5 = tpu.matmul %3, %4, %cst {dimension_numbers = #tpu.dot_dimension_numbers<[1], [0], [0], [1], [0, 0, 1, 1], [], []>} : vector<16x128xf32>, vector<128x128xf32>, vector<16x128xf32> -> vector<16x128xf32>
    %c0_4 = arith.constant 0 : index
    %c0_5 = arith.constant 0 : index
    %6 = vector.load %arg4[%c0_4, %c0_5] : memref<1x128xf32, #tpu.memory_space<vmem>>, vector<1x128xf32>
    %7 = vector.broadcast %6 : vector<1x128xf32> to vector<16x128xf32>
    %8 = arith.addf %5, %7 : vector<16x128xf32>
    %9 = arith.mulf %8, %8 : vector<16x128xf32>
    %10 = arith.mulf %9, %8 : vector<16x128xf32>
    %cst_6 = arith.constant 5.000000e-01 : f32
    %11 = vector.broadcast %cst_6 : f32 to vector<16x128xf32>
    %12 = arith.mulf %11, %8 : vector<16x128xf32>
    %cst_7 = arith.constant 4.471500e-02 : f32
    %13 = vector.broadcast %cst_7 : f32 to vector<16x128xf32>
    %14 = arith.addf %8, %13 : vector<16x128xf32>
    %cst_8 = arith.constant 0.797884583 : f32
    %15 = vector.broadcast %cst_8 : f32 to vector<16x128xf32>
    %16 = arith.mulf %15, %14 : vector<16x128xf32>
    %17 = arith.mulf %16, %10 : vector<16x128xf32>
    %18 = math.tanh %17 : vector<16x128xf32>
    %cst_9 = arith.constant 1.000000e+00 : f32
    %19 = vector.broadcast %cst_9 : f32 to vector<16x128xf32>
    %20 = arith.addf %19, %18 : vector<16x128xf32>
    %21 = arith.mulf %12, %20 : vector<16x128xf32>
    %c0_10 = arith.constant 0 : index
    %c0_11 = arith.constant 0 : index
    %22 = vector.load %arg8[%c0_10, %c0_11] : memref<16x128xf32, #tpu.memory_space<vmem>>, vector<16x128xf32>
    %c0_12 = arith.constant 0 : index
    %c0_13 = arith.constant 0 : index
    %23 = vector.load %arg5[%c0_12, %c0_13] : memref<128x128xf32, #tpu.memory_space<vmem>>, vector<128x128xf32>
    %cst_14 = arith.constant dense<0.000000e+00> : vector<16x128xf32>
    %24 = tpu.matmul %21, %23, %cst_14 {dimension_numbers = #tpu.dot_dimension_numbers<[1], [0], [0], [1], [0, 0, 1, 1], [], []>} : vector<16x128xf32>, vector<128x128xf32>, vector<16x128xf32> -> vector<16x128xf32>
    %25 = arith.addf %22, %24 : vector<16x128xf32>
    %c0_15 = arith.constant 0 : index
    %c0_16 = arith.constant 0 : index
    %26 = vector.load %arg8[%c0_15, %c0_16] : memref<16x128xf32, #tpu.memory_space<vmem>>, vector<16x128xf32>
    tpu.vector_store %arg8[%c0_15, %c0_16], %25 {strides = array<i32>} : memref<16x128xf32, #tpu.memory_space<vmem>>, vector<16x128xf32>,
    %c0_i32_17 = arith.constant 0 : i32
    %27 = arith.cmpi eq, %arg1, %c0_i32_17 : i32
    %28 = arith.extui %27 : i1 to i32
    %c0_i32_18 = arith.constant 0 : i32
    %29 = arith.cmpi ne, %28, %c0_i32_18 : i32
    scf.if %29 {
      %c0_19 = arith.constant 0 : index
      %c0_20 = arith.constant 0 : index
      %30 = vector.load %arg8[%c0_19, %c0_20] : memref<16x128xf32, #tpu.memory_space<vmem>>, vector<16x128xf32>
      %c0_21 = arith.constant 0 : index
      %c0_22 = arith.constant 0 : index
      %31 = vector.load %arg7[%c0_21, %c0_22] : memref<16x128xf32, #tpu.memory_space<vmem>>, vector<16x128xf32>
      tpu.vector_store %arg7[%c0_21, %c0_22], %30 {strides = array<i32>} : memref<16x128xf32, #tpu.memory_space<vmem>>, vector<16x128xf32>,
    } else {
    }
    return
  }
  func.func @transform_0(%arg0: i32, %arg1: i32) -> (i32, i32) {
    %c0_i32 = arith.constant 0 : i32
    %c0_i32_0 = arith.constant 0 : i32
    return %arg0, %c0_i32 : i32, i32
  }
  func.func @transform_1(%arg0: i32, %arg1: i32) -> (i32, i32) {
    %c0_i32 = arith.constant 0 : i32
    %c0_i32_0 = arith.constant 0 : i32
    return %c0_i32, %arg1 : i32, i32
  }
  func.func @transform_2(%arg0: i32, %arg1: i32) -> (i32, i32) {
    %c0_i32 = arith.constant 0 : i32
    %c0_i32_0 = arith.constant 0 : i32
    return %c0_i32, %arg1 : i32, i32
  }
  func.func @transform_3(%arg0: i32, %arg1: i32) -> (i32, i32) {
    %c0_i32 = arith.constant 0 : i32
    %c0_i32_0 = arith.constant 0 : i32
    return %arg1, %c0_i32 : i32, i32
  }
  func.func @transform_4(%arg0: i32, %arg1: i32) -> (i32, i32) {
    %c0_i32 = arith.constant 0 : i32
    %c0_i32_0 = arith.constant 0 : i32
    %c0_i32_1 = arith.constant 0 : i32
    return %c0_i32, %c0_i32_0 : i32, i32
  }
  func.func @transform_5(%arg0: i32, %arg1: i32) -> (i32, i32) {
    %c0_i32 = arith.constant 0 : i32
    %c0_i32_0 = arith.constant 0 : i32
    return %arg0, %c0_i32 : i32, i32
  }
}

</mosaic_0001>

<llo_original>
// kernel: tpu_custom_call.1
$region0: #{tpu_custom_call.1}
  #allocation0 [shape = 'u32[]', space=smem, size = 0x4, offset = 0x4, fixed_abs, tag = 'smem constant byte address 0x4 - core index']
  #allocation1 [shape = 'u32[72,128]{1,0:T(1,128)}', space=vmem, size = 0x9000, scoped, tag = 'internal scratch']
  #allocation2 [shape = 'f32[16,128]{1,0:T(8,128)}', space=vmem, size = 0x2000, scoped, tag = 'scratch operand']
  %s0 = inlined_call_operand.hbm [shape: f32[16,128], index: 0, kind: input, shape index: {}]
  %s1 = inlined_call_operand.hbm [shape: f32[128,128], index: 1, kind: input, shape index: {}]
  %s2 = inlined_call_operand.vmem [shape: f32[1,128], index: 2, kind: input, shape index: {}]
  %s3 = inlined_call_operand.hbm [shape: f32[128,128], index: 3, kind: input, shape index: {}]
  %s4 = inlined_call_operand.vmem [shape: f32[1,128], index: 4, kind: input, shape index: {}]
  %s5 = inlined_call_operand.hbm [shape: f32[16,128], index: 5, kind: output, shape index: {}]
  %s6 = sld [smem:[#allocation0]]
  $region50: #{tpu_custom_call.1} parent=0
    _
  %s8 = ssub.s32 1, %s6
  %s9 = scalar_select 0, %s8, %s6
  $region1: #{tpu_custom_call.1} parent=0
    #allocation3 [shape = 'u8[8192]{0}', space=vmem, size = 0x2000, scoped, tag = 'input window, operand 0, single buffered']
    #allocation4 [shape = 's32[1]{0}', space=sflag, size = 0x4, scoped, tag = 'scoped memory for tpu_custom_call.1']
    #allocation5 [shape = 's32[1]{0}', space=sflag, size = 0x4, scoped, tag = 'scoped memory for tpu_custom_call.1']
    #allocation6 [shape = 'u8[65536]{0}', space=vmem, size = 0x10000, scoped, tag = 'input window, operand 1, single buffered']
    #allocation7 [shape = 's32[1]{0}', space=sflag, size = 0x4, scoped, tag = 'scoped memory for tpu_custom_call.1']
    #allocation8 [shape = 'u8[65536]{0}', space=vmem, size = 0x10000, scoped, tag = 'input window, operand 3, single buffered']
    #allocation9 [shape = 'u8[8192]{0}', space=vmem, size = 0x2000, scoped, tag = 'output window, operand 0, single buffered']
    %10 = vsyncpa [#allocation4], 0
    %11 = vsyncpa [#allocation7], 0
    %12 = vsyncpa [#allocation5], 0
    // Predicated region
    $region2: #{tpu_custom_call.1} parent=1 // pred_check
      _
    $region3: #{tpu_custom_call.1} parent=1 // pred_check_branch
      %14 = sbr.rel (0) target = $region5
    $region4: #{tpu_custom_call.1} parent=1 // pred_region
      %16 = vsyncadd [#allocation4], 0
      %s17 = sshll.u32 %s0, 4
      %s18 = int_to_ptr.hbm [resolvable:$true] %s17
      %s19 = sshll.u32 [#allocation3], 4
      %s20 = int_to_ptr.vmem [resolvable:$true] %s19
      %25 = dma.hbm_to_vmem [thread:$0]  %s18, 256, %s20, [#allocation4], 128, 128, 8
    $region5: #{tpu_custom_call.1} parent=1 // pred_fallthru
      _
    // Predicated region
    $region6: #{tpu_custom_call.1} parent=1 // pred_check
      _
    $region7: #{tpu_custom_call.1} parent=1 // pred_check_branch
      %27 = sbr.rel (0) target = $region9
    $region8: #{tpu_custom_call.1} parent=1 // pred_region
      %29 = vsyncadd [#allocation7], 0
      %s30 = sshll.u32 %s1, 4
      %s31 = int_to_ptr.hbm [resolvable:$true] %s30
      %s32 = sshll.u32 [#allocation6], 4
      %s33 = int_to_ptr.vmem [resolvable:$true] %s32
      %38 = dma.hbm_to_vmem [thread:$0]  %s31, 2048, %s33, [#allocation7], 128, 128, 8
    $region9: #{tpu_custom_call.1} parent=1 // pred_fallthru
      _
    // Predicated region
    $region10: #{tpu_custom_call.1} parent=1 // pred_check
      _
    $region11: #{tpu_custom_call.1} parent=1 // pred_check_branch
      %40 = sbr.rel (0) target = $region13
    $region12: #{tpu_custom_call.1} parent=1 // pred_region
      _
    $region13: #{tpu_custom_call.1} parent=1 // pred_fallthru
      _
    // Predicated region
    $region14: #{tpu_custom_call.1} parent=1 // pred_check
      _
    $region15: #{tpu_custom_call.1} parent=1 // pred_check_branch
      %42 = sbr.rel (0) target = $region17
    $region16: #{tpu_custom_call.1} parent=1 // pred_region
      %44 = vsyncadd [#allocation7], 0
      %s45 = sshll.u32 %s3, 4
      %s46 = int_to_ptr.hbm [resolvable:$true] %s45
      %s47 = sshll.u32 [#allocation8], 4
      %s48 = int_to_ptr.vmem [resolvable:$true] %s47
      %53 = dma.hbm_to_vmem [thread:$0]  %s46, 2048, %s48, [#allocation7], 128, 128, 8
    $region17: #{tpu_custom_call.1} parent=1 // pred_fallthru
      _
    // Predicated region
    $region18: #{tpu_custom_call.1} parent=1 // pred_check
      _
    $region19: #{tpu_custom_call.1} parent=1 // pred_check_branch
      %55 = sbr.rel (0) target = $region21
    $region20: #{tpu_custom_call.1} parent=1 // pred_region
      _
    $region21: #{tpu_custom_call.1} parent=1 // pred_fallthru
      _
    // Predicated region
    $region22: #{tpu_custom_call.1} parent=1 // pred_check
      _
    $region23: #{tpu_custom_call.1} parent=1 // pred_check_branch
      %57 = sbr.rel (0) target = $region25
    $region24: #{tpu_custom_call.1} parent=1 // pred_region
      %59 = dma.done [#allocation4], 256
    $region25: #{tpu_custom_call.1} parent=1 // pred_fallthru
      _
    // Predicated region
    $region26: #{tpu_custom_call.1} parent=1 // pred_check
      _
    $region27: #{tpu_custom_call.1} parent=1 // pred_check_branch
      %61 = sbr.rel (0) target = $region29
    $region28: #{tpu_custom_call.1} parent=1 // pred_region
      %63 = dma.done [#allocation7], 2048
    $region29: #{tpu_custom_call.1} parent=1 // pred_fallthru
      _
    // Predicated region
    $region30: #{tpu_custom_call.1} parent=1 // pred_check
      _
    $region31: #{tpu_custom_call.1} parent=1 // pred_check_branch
      %65 = sbr.rel (0) target = $region33
    $region32: #{tpu_custom_call.1} parent=1 // pred_region
      %67 = dma.done [#allocation7], 2048
    $region33: #{tpu_custom_call.1} parent=1 // pred_fallthru
      _
    %p68 = scmp.eq.s32.totalorder 0, 0
    // Predicated region
    $region34: #{tpu_custom_call.1} parent=1 // pred_check
      %p69 = pneg %p68
    $region35: #{tpu_custom_call.1} parent=1 // pred_check_branch
      %71 = sbr.rel (%p69) target = $region37
    $region36: #{tpu_custom_call.1} parent=1 // pred_region
      %v72 = vld [vmem:[%s4] sm:$0x1]
      %v74 = vperm.slane %v72, 0
      %76 = vst [vmem:[#allocation2] sm:$0xff] %v74
      %77 = vst [vmem:[#allocation2 + $0x8] sm:$0xff] %v74
    $region37: #{tpu_custom_call.1} parent=1 // pred_fallthru
      _
    %v78 = vld [vmem:[#allocation3] sm:$0xff]
    %v79 = vld [vmem:[#allocation3 + $0x8] sm:$0xff]
    %v80 = vld [vmem:[#allocation6] sm:$0xff]
    %v81 = vld [vmem:[#allocation6 + $0x8] sm:$0xff]
    %v82 = vld [vmem:[#allocation6 + $0x10] sm:$0xff]
    %v83 = vld [vmem:[#allocation6 + $0x18] sm:$0xff]
    %v84 = vld [vmem:[#allocation6 + $0x20] sm:$0xff]
    %v85 = vld [vmem:[#allocation6 + $0x28] sm:$0xff]
    %v86 = vld [vmem:[#allocation6 + $0x30] sm:$0xff]
    %v87 = vld [vmem:[#allocation6 + $0x38] sm:$0xff]
    %v88 = vld [vmem:[#allocation6 + $0x40] sm:$0xff]
    %v89 = vld [vmem:[#allocation6 + $0x48] sm:$0xff]
    %v90 = vld [vmem:[#allocation6 + $0x50] sm:$0xff]
    %v91 = vld [vmem:[#allocation6 + $0x58] sm:$0xff]
    %v92 = vld [vmem:[#allocation6 + $0x60] sm:$0xff]
    %v93 = vld [vmem:[#allocation6 + $0x68] sm:$0xff]
    %v94 = vld [vmem:[#allocation6 + $0x70] sm:$0xff]
    %v95 = vld [vmem:[#allocation6 + $0x78] sm:$0xff]
    %v96 = vld [vmem:[%s2] sm:$0x1]
    %v98 = vperm.slane %v96, 0
    %100 = vmatpush.msra.mxu0 %v95
    %101 = vmatpush.msra.mxu0 %v94
    %102 = vmatpush.msra.mxu0 %v93
    %103 = vmatpush.msra.mxu0 %v92
    %104 = vmatpush.msra.mxu0 %v91
    %105 = vmatpush.msra.mxu0 %v90
    %106 = vmatpush.msra.mxu0 %v89
    %107 = vmatpush.msra.mxu0 %v88
    %108 = vmatpush.msra.mxu0 %v87
    %109 = vmatpush.msra.mxu0 %v86
    %110 = vmatpush.msra.mxu0 %v85
    %111 = vmatpush.msra.mxu0 %v84
    %112 = vmatpush.msra.mxu0 %v83
    %113 = vmatpush.msra.mxu0 %v82
    %114 = vmatpush.msra.mxu0 %v81
    %115 = vmatpush.msra.mxu0 %v80
    %116 = vmatmul.f32.gmra.mxu0 %v78
    %v117 = vpop.f32.mrf.mxu0
    %v118 = vadd.f32 %v98, %v117
    %119 = vmatmul.f32.gmra.mxu0 %v79
    %v120 = vpop.f32.mrf.mxu0
    %v121 = vadd.f32 %v98, %v120
    %122 = vdwg.mxu0
    %v123 = vmul.f32 %v118, %v118
    %v124 = vmul.f32 %v121, %v121
    %v125 = vmul.f32 %v123, %v118
    %v126 = vmul.f32 %v124, %v121
    %v127 = vmul.f32 %v118, 0.5
    %v128 = vmul.f32 %v121, 0.5
    %v129 = vadd.f32 %v118, 0.044715
    %v130 = vadd.f32 %v121, 0.044715
    %v131 = vmul.f32 %v129, 0.7978846
    %v132 = vmul.f32 %v130, 0.7978846
    %v133 = vmul.f32 %v131, %v125
    %v134 = vmul.f32 %v132, %v126
    %v135 = vtanh.pop %v133
    %v136 = vtanh.pop %v134
    %v137 = vadd.f32 %v135, 1.0
    %v138 = vadd.f32 %v136, 1.0
    %v139 = vmul.f32 %v127, %v137
    %v140 = vmul.f32 %v128, %v138
    %v141 = vld [vmem:[#allocation2] sm:$0xff]
    %v142 = vld [vmem:[#allocation2 + $0x8] sm:$0xff]
    %v143 = vld [vmem:[#allocation8] sm:$0xff]
    %v144 = vld [vmem:[#allocation8 + $0x8] sm:$0xff]
    %v145 = vld [vmem:[#allocation8 + $0x10] sm:$0xff]
    %v146 = vld [vmem:[#allocation8 + $0x18] sm:$0xff]
    %v147 = vld [vmem:[#allocation8 + $0x20] sm:$0xff]
    %v148 = vld [vmem:[#allocation8 + $0x28] sm:$0xff]
    %v149 = vld [vmem:[#allocation8 + $0x30] sm:$0xff]
    %v150 = vld [vmem:[#allocation8 + $0x38] sm:$0xff]
    %v151 = vld [vmem:[#allocation8 + $0x40] sm:$0xff]
    %v152 = vld [vmem:[#allocation8 + $0x48] sm:$0xff]
    %v153 = vld [vmem:[#allocation8 + $0x50] sm:$0xff]
    %v154 = vld [vmem:[#allocation8 + $0x58] sm:$0xff]
    %v155 = vld [vmem:[#allocation8 + $0x60] sm:$0xff]
    %v156 = vld [vmem:[#allocation8 + $0x68] sm:$0xff]
    %v157 = vld [vmem:[#allocation8 + $0x70] sm:$0xff]
    %v158 = vld [vmem:[#allocation8 + $0x78] sm:$0xff]
    %159 = vmatpush.msra.mxu0 %v158
    %160 = vmatpush.msra.mxu0 %v157
    %161 = vmatpush.msra.mxu0 %v156
    %162 = vmatpush.msra.mxu0 %v155
    %163 = vmatpush.msra.mxu0 %v154
    %164 = vmatpush.msra.mxu0 %v153
    %165 = vmatpush.msra.mxu0 %v152
    %166 = vmatpush.msra.mxu0 %v151
    %167 = vmatpush.msra.mxu0 %v150
    %168 = vmatpush.msra.mxu0 %v149
    %169 = vmatpush.msra.mxu0 %v148
    %170 = vmatpush.msra.mxu0 %v147
    %171 = vmatpush.msra.mxu0 %v146
    %172 = vmatpush.msra.mxu0 %v145
    %173 = vmatpush.msra.mxu0 %v144
    %174 = vmatpush.msra.mxu0 %v143
    %175 = vmatmul.f32.gmra.mxu0 %v139
    %v176 = vpop.f32.mrf.mxu0
    %v177 = vadd.f32 0.0, %v176
    %178 = vmatmul.f32.gmra.mxu0 %v140
    %v179 = vpop.f32.mrf.mxu0
    %v180 = vadd.f32 0.0, %v179
    %181 = vdwg.mxu0
    %v182 = vadd.f32 %v141, %v177
    %v183 = vadd.f32 %v142, %v180
    %184 = vst [vmem:[#allocation2] sm:$0xff] %v182
    %185 = vst [vmem:[#allocation2 + $0x8] sm:$0xff] %v183
    // Predicated region
    $region38: #{tpu_custom_call.1} parent=1 // pred_check
      %p186 = pneg %p68
    $region39: #{tpu_custom_call.1} parent=1 // pred_check_branch
      %188 = sbr.rel (%p186) target = $region41
    $region40: #{tpu_custom_call.1} parent=1 // pred_region
      %v189 = vld [vmem:[#allocation2] sm:$0xff]
      %v190 = vld [vmem:[#allocation2 + $0x8] sm:$0xff]
      %191 = vst [vmem:[#allocation9] sm:$0xff] %v189
      %192 = vst [vmem:[#allocation9 + $0x8] sm:$0xff] %v190
    $region41: #{tpu_custom_call.1} parent=1 // pred_fallthru
      _
    // Predicated region
    $region42: #{tpu_custom_call.1} parent=1 // pred_check
      _
    $region43: #{tpu_custom_call.1} parent=1 // pred_check_branch
      %194 = sbr.rel (0) target = $region45
    $region44: #{tpu_custom_call.1} parent=1 // pred_region
      %196 = vsyncadd [#allocation5], 0
      %s197 = sshll.u32 [#allocation9], 4
      %s198 = int_to_ptr.vmem [resolvable:$true] %s197
      %s199 = sshll.u32 %s5, 4
      %s200 = int_to_ptr.hbm [resolvable:$true] %s199
      %205 = dma.vmem_to_hbm [thread:$0]  %s198, 256, %s200, [#allocation5], 128, 128, 8
    $region45: #{tpu_custom_call.1} parent=1 // pred_fallthru
      _
    // Predicated region
    $region46: #{tpu_custom_call.1} parent=1 // pred_check
      _
    $region47: #{tpu_custom_call.1} parent=1 // pred_check_branch
      %207 = sbr.rel (0) target = $region49
    $region48: #{tpu_custom_call.1} parent=1 // pred_region
      %209 = dma.done [#allocation5], 256
    $region49: #{tpu_custom_call.1} parent=1 // pred_fallthru
      _
    %210 = vsyncpa [#allocation4], 1
    %211 = vsyncpa [#allocation7], 1
    %212 = vsyncpa [#allocation5], 1

</llo_original>
